<compile_context>
chip_gen: v7x
topology: tpu7x:2x2x1
jax: 0.10.0
libtpu: 0.0.40
codegen_flags: <defaults>
</compile_context>

<pallas_src>
import math

import jax
import jax.numpy as jnp
import numpy as np
from jax.experimental import pallas as pl
from jax.experimental.pallas import tpu as pltpu


# ----------------------------------------------------------------------------
# Pallas kernel: one LSTM layer, both directions fused, full recurrence inside.
# ----------------------------------------------------------------------------
def _lstm_layer_kernel(lens_ref, nv_ref,                      # SMEM (prefetch)
                       x_ref, wih_ref, whh_ref, b_ref,        # VMEM inputs
                       out_ref, hN_ref, cN_ref):              # VMEM outputs
    S, F = wih_ref.shape[0], wih_ref.shape[1]                 # input streams
    H = whh_ref.shape[0]
    T, B, _ = out_ref.shape

    d = pl.program_id(0)                   # direction: 0 = forward, 1 = reverse
    reverse = d == 1
    max_len = lens_ref[0]                  # lengths sorted descending

    # Padded timesteps / rows must read back as zeros (pad_packed_sequence).
    out_ref[...] = jnp.zeros(out_ref.shape, out_ref.dtype)

    row_ids = jax.lax.broadcasted_iota(jnp.int32, (B, 1), 0)

    def step(s_idx, carry):
        h, c = carry                                              # (B, H) f32
        t = jnp.where(reverse, max_len - 1 - s_idx, s_idx)

        # Gates: bf16 MXU dots with f32 accumulation.
        gates = jnp.dot(h.astype(whh_ref.dtype), whh_ref[...],
                        preferred_element_type=jnp.float32)
        for s in range(S):               # static: S = 1 (layer 0) or num_dirs
            gates = gates + jnp.dot(x_ref[s * T + t], wih_ref[s],
                                    preferred_element_type=jnp.float32)
        gates = gates + b_ref[...]                                # (B, 4H)

        # PyTorch gate order: input, forget, cell(g), output.
        i_g = jax.nn.sigmoid(gates[:, 0 * H:1 * H])
        f_g = jax.nn.sigmoid(gates[:, 1 * H:2 * H])
        g_g = jnp.tanh(gates[:, 2 * H:3 * H])
        o_g = jax.nn.sigmoid(gates[:, 3 * H:4 * H])

        c_new = f_g * c + i_g * g_g
        h_new = o_g * jnp.tanh(c_new)

        valid = row_ids < nv_ref[t]        # rows [0, nvalid[t]) are unpadded
        c = jnp.where(valid, c_new, c)     # freeze state on padded rows
        h = jnp.where(valid, h_new, h)
        out_ref[t] = jnp.where(valid, h_new, 0.0).astype(out_ref.dtype)
        return h, c

    h0 = jnp.zeros((B, H), jnp.float32)
    c0 = jnp.zeros((B, H), jnp.float32)
    hT, cT = jax.lax.fori_loop(0, max_len, step, (h0, c0))
    hN_ref[...] = hT                       # state at t == lengths[b] - 1 (fwd)
    cN_ref[...] = cT


def lstm_layer(x_flat, lens, nvalid, w_ih, w_hh, bias):
    """One fused (bi)directional LSTM layer over a padded batch.

    x_flat : (S*T, B, F)  bf16   input stream(s), stacked time-major
    lens   : (B,)         int32  lengths, sorted descending
    nvalid : (T,)         int32  number of valid batch rows at each timestep
    w_ih   : (D, S, F, 4H) bf16  transposed input weights, split per stream
    w_hh   : (D, H, 4H)    bf16  transposed recurrent weights
    bias   : (D, 1, 4H)    f32   b_ih + b_hh
    """
    D, S, F, H4 = w_ih.shape
    H = H4 // 4
    ST, B, _ = x_flat.shape
    T = ST // S

    out, h_n, c_n = pl.pallas_call(
        _lstm_layer_kernel,
        out_shape=(jax.ShapeDtypeStruct((D, T, B, H), jnp.bfloat16),
                   jax.ShapeDtypeStruct((D, B, H), jnp.float32),
                   jax.ShapeDtypeStruct((D, B, H), jnp.float32)),
        grid_spec=pltpu.PrefetchScalarGridSpec(
            num_scalar_prefetch=2,          # lens, nvalid -> SMEM
            grid=(D,),                      # one grid step per direction
            in_specs=[
                pl.BlockSpec((ST, B, F), lambda d, *_: (0, 0, 0)),
                pl.BlockSpec((pl.Squeezed(), S, F, H4),
                             lambda d, *_: (d, 0, 0, 0)),
                pl.BlockSpec((pl.Squeezed(), H, H4),
                             lambda d, *_: (d, 0, 0)),
                pl.BlockSpec((pl.Squeezed(), 1, H4),
                             lambda d, *_: (d, 0, 0)),
            ],
            out_specs=[
                pl.BlockSpec((pl.Squeezed(), T, B, H),
                             lambda d, *_: (d, 0, 0, 0)),
                pl.BlockSpec((pl.Squeezed(), B, H), lambda d, *_: (d, 0, 0)),
                pl.BlockSpec((pl.Squeezed(), B, H), lambda d, *_: (d, 0, 0)),
            ]),
        compiler_params=pltpu.CompilerParams(
            dimension_semantics=("parallel",)),   # directions are independent
    )(lens, nvalid, x_flat, w_ih, w_hh, bias)
    return out, h_n, c_n


# ----------------------------------------------------------------------------
# Encoder module: deterministic parameter init + forward pass.
# ----------------------------------------------------------------------------
class EncoderPallas:
    def __init__(self, opt, key):
        self.num_embeddings = opt['num_embeddings']
        self.embed_size = opt['embed_size']
        self.hidden_size = opt['hidden_size']
        self.num_layers = opt['num_layers']
        self.dropout_rate = opt['dropout_rate']
        self.bidirectional = opt['bidirectional']
        self.num_dirs = 2 if self.bidirectional else 1

        E, H, D = self.embed_size, self.hidden_size, self.num_dirs
        stdv = 1.0 / math.sqrt(H)

        key, ek = jax.random.split(key)
        # nn.Embedding default init: N(0, 1)
        self.embed = jax.random.normal(ek, (self.num_embeddings, E), jnp.float32)

        # nn.LSTM default init: U(-1/sqrt(H), 1/sqrt(H)).  Raw PyTorch-layout
        # params kept for the reference; stacked/transposed bf16 copies for
        # the kernel.
        self.lstm = {}
        self.kernel_params = []
        for l in range(self.num_layers):
            in_size = E if l == 0 else H * D
            S = 1 if l == 0 else D              # input streams (fwd / bwd)
            F = E if l == 0 else H
            wih_k, whh_k, b_k = [], [], []
            for d in range(D):
                key, k1, k2, k3, k4 = jax.random.split(key, 5)
                p = dict(
                    w_ih=jax.random.uniform(k1, (4 * H, in_size), jnp.float32,
                                            -stdv, stdv),
                    w_hh=jax.random.uniform(k2, (4 * H, H), jnp.float32,
                                            -stdv, stdv),
                    b_ih=jax.random.uniform(k3, (4 * H,), jnp.float32,
                                            -stdv, stdv),
                    b_hh=jax.random.uniform(k4, (4 * H,), jnp.float32,
                                            -stdv, stdv),
                )
                self.lstm[(l, d)] = p
                wih_k.append(p['w_ih'].T.reshape(S, F, 4 * H))  # split streams
                whh_k.append(p['w_hh'].T)
                b_k.append((p['b_ih'] + p['b_hh']).reshape(1, 4 * H))
            self.kernel_params.append(dict(
                w_ih=jnp.stack(wih_k).astype(jnp.bfloat16),     # (D, S, F, 4H)
                w_hh=jnp.stack(whh_k).astype(jnp.bfloat16),     # (D, H, 4H)
                bias=jnp.stack(b_k).astype(jnp.float32),        # (D, 1, 4H)
            ))

    def forward(self, x, lengths, hidden=None):
        # hidden=None -> zero initial states (matches nn.LSTM default).
        assert hidden is None
        T, B = x.shape
        H, D, L = self.hidden_size, self.num_dirs, self.num_layers
        lengths = jnp.asarray(lengths, jnp.int32)

        # lengths sorted descending (pack_padded_sequence enforce_sorted=True):
        # valid rows at timestep t form the prefix [0, nvalid[t]).
        nvalid = jnp.sum(lengths[None, :] >
                         jnp.arange(T, dtype=jnp.int32)[:, None],
                         axis=1).astype(jnp.int32)              # (T,)

        # Embedding lookup (gather) -- glue in plain JAX; bf16 for the MXU.
        layer_x = self.embed[x].astype(jnp.bfloat16)[None]      # (1, T, B, E)

        h_list, c_list, out = [], [], None
        for l in range(L):
            p = self.kernel_params[l]
            S, _, _, F = layer_x.shape[0], layer_x.shape[1], 0, layer_x.shape[3]
            x_flat = layer_x.reshape(S * T, B, F)
            out, h_n, c_n = lstm_layer(x_flat, lengths, nvalid,
                                       p['w_ih'], p['w_hh'], p['bias'])
            h_list.append(h_n)                                  # (D, B, H)
            c_list.append(c_n)
            layer_x = out                    # (D, T, B, H) bf16 -> next layer
            # TODO(synk): inter-layer dropout omitted (eval-mode semantics).

        # output: (T, B, D*H), [forward, backward] concatenated on features.
        output = jnp.transpose(out, (1, 2, 0, 3)).reshape(T, B, D * H)
        output = output.astype(jnp.float32)

        h_n = jnp.stack(h_list)                                 # (L, D, B, H)
        c_n = jnp.stack(c_list)
        if self.bidirectional:
            # get_forward_op: keep only forward-direction states per layer.
            h_n = h_n[:, 0]
            c_n = c_n[:, 0]
        else:
            h_n = h_n.reshape(L * D, B, H)
            c_n = c_n.reshape(L * D, B, H)
        return output, (h_n, c_n)


# ----------------------------------------------------------------------------
# Pure-JAX f32 reference (same math, no Pallas) used as a sanity check.
# ----------------------------------------------------------------------------
def _ref_lstm_layer(x, lengths, w_ih, w_hh, b_ih, b_hh, reverse):
    T, B, _ = x.shape
    H = w_ih.shape[0] // 4
    h = jnp.zeros((B, H), jnp.float32)
    c = jnp.zeros((B, H), jnp.float32)
    outs = [None] * T
    order = range(T - 1, -1, -1) if reverse else range(T)
    for t in order:
        gates = x[t] @ w_ih.T + h @ w_hh.T + b_ih + b_hh
        i_g = jax.nn.sigmoid(gates[:, 0 * H:1 * H])
        f_g = jax.nn.sigmoid(gates[:, 1 * H:2 * H])
        g_g = jnp.tanh(gates[:, 2 * H:3 * H])
        o_g = jax.nn.sigmoid(gates[:, 3 * H:4 * H])
        c_new = f_g * c + i_g * g_g
        h_new = o_g * jnp.tanh(c_new)
        valid = (t < lengths)[:, None]
        c = jnp.where(valid, c_new, c)
        h = jnp.where(valid, h_new, h)
        outs[t] = jnp.where(valid, h_new, 0.0)
    return jnp.stack(outs), h, c


def _ref_encoder(enc, x, lengths):
    T, B = x.shape
    H = enc.hidden_size
    layer_in = enc.embed[x]
    h_list, c_list = [], []
    for l in range(enc.num_layers):
        dir_outs = []
        for d in range(enc.num_dirs):
            w = enc.lstm[(l, d)]
            out, h_n, c_n = _ref_lstm_layer(
                layer_in, lengths, w['w_ih'], w['w_hh'],
                w['b_ih'], w['b_hh'], reverse=(d == 1))
            dir_outs.append(out)
            h_list.append(h_n)
            c_list.append(c_n)
        layer_in = (jnp.concatenate(dir_outs, axis=-1)
                    if enc.num_dirs == 2 else dir_outs[0])
    h_n = jnp.stack(h_list)
    c_n = jnp.stack(c_list)
    if enc.bidirectional:
        h_n = h_n.reshape(enc.num_layers, 2, B, H)[:, 0]
        c_n = c_n.reshape(enc.num_layers, 2, B, H)[:, 0]
    return layer_in, (h_n, c_n)


if __name__ == "__main__":
    opt = dict(num_embeddings=50, embed_size=16, hidden_size=32,
               num_layers=2, dropout_rate=0.0, bidirectional=True)

    key = jax.random.PRNGKey(0)
    key, xk = jax.random.split(key)
    T, B = 8, 4
    x = jax.random.randint(xk, (T, B), 0, opt['num_embeddings'], jnp.int32)
    lengths = jnp.array([8, 7, 5, 3], jnp.int32)   # sorted descending

    enc = EncoderPallas(opt, key)

    output, (h_n, c_n) = enc.forward(x, lengths)
    jax.block_until_ready((output, h_n, c_n))

    assert output.shape == (T, B, opt['hidden_size'] * 2)
    assert h_n.shape == (opt['num_layers'], B, opt['hidden_size'])
    assert c_n.shape == (opt['num_layers'], B, opt['hidden_size'])

    # Kernel uses bf16 matmul inputs / bf16 inter-layer activations (f32
    # accumulation and state), so compare against the f32 reference with a
    # bf16-appropriate tolerance.
    ref_out, (ref_h, ref_c) = _ref_encoder(enc, x, lengths)
    np.testing.assert_allclose(np.asarray(output), np.asarray(ref_out),
                               rtol=3e-2, atol=3e-2)
    np.testing.assert_allclose(np.asarray(h_n), np.asarray(ref_h),
                               rtol=3e-2, atol=3e-2)
    np.testing.assert_allclose(np.asarray(c_n), np.asarray(ref_c),
                               rtol=3e-2, atol=3e-2)

    print("KERNEL_OK")
</pallas_src>

<mosaic_0001>
module attributes {stable_mosaic.version = 11 : i64} {
  func.func @_lstm_layer_kernel(%arg0: i32, %arg1: memref<4xi32, #tpu.memory_space<smem>>, %arg2: memref<8xi32, #tpu.memory_space<smem>>, %arg3: memref<8x4x16xbf16, #tpu.memory_space<vmem>>, %arg4: memref<1x1x16x128xbf16, #tpu.memory_space<vmem>>, %arg5: memref<1x32x128xbf16, #tpu.memory_space<vmem>>, %arg6: memref<1x1x128xf32, #tpu.memory_space<vmem>>, %arg7: memref<1x8x4x32xbf16, #tpu.memory_space<vmem>>, %arg8: memref<1x4x32xf32, #tpu.memory_space<vmem>>, %arg9: memref<1x4x32xf32, #tpu.memory_space<vmem>>) attributes {dimension_semantics = [#tpu.dimension_semantics<parallel>], iteration_bounds = array<i64: 2>, scalar_prefetch = 2 : i64, scratch_operands = 0 : i64, tpu.core_type = #tpu.core_type<tc>, window_params = [{pipeline_mode = #tpu.pipeline_mode<synchronous>, transform_indices = @transform_0, window_bounds = array<i64: 8, 4, 16>}, {transform_indices = @transform_1, window_bounds = array<i64: 1, 1, 16, 128>}, {transform_indices = @transform_2, window_bounds = array<i64: 1, 32, 128>}, {transform_indices = @transform_3, window_bounds = array<i64: 1, 1, 128>}, {transform_indices = @transform_4, window_bounds = array<i64: 1, 8, 4, 32>}, {transform_indices = @transform_5, window_bounds = array<i64: 1, 4, 32>}, {transform_indices = @transform_6, window_bounds = array<i64: 1, 4, 32>}]} {
    %c1_i32 = arith.constant 1 : i32
    %0 = arith.cmpi eq, %arg0, %c1_i32 : i32
    %c0 = arith.constant 0 : index
    %1 = memref.load %arg1[%c0] : memref<4xi32, #tpu.memory_space<smem>>
    %cst = arith.constant 0.000000e+00 : bf16
    %2 = vector.broadcast %cst : bf16 to vector<8x4x32xbf16>
    %c0_0 = arith.constant 0 : index
    %c0_1 = arith.constant 0 : index
    %c0_2 = arith.constant 0 : index
    %c0_3 = arith.constant 0 : index
    %3 = vector.load %arg7[%c0_0, %c0_1, %c0_2, %c0_3] : memref<1x8x4x32xbf16, #tpu.memory_space<vmem>>, vector<1x8x4x32xbf16>
    %4 = vector.shape_cast %3 : vector<1x8x4x32xbf16> to vector<8x4x32xbf16>
    %5 = vector.shape_cast %2 : vector<8x4x32xbf16> to vector<1x8x4x32xbf16>
    tpu.vector_store %arg7[%c0_0, %c0_1, %c0_2, %c0_3], %5 {strides = array<i32>} : memref<1x8x4x32xbf16, #tpu.memory_space<vmem>>, vector<1x8x4x32xbf16>,
    %6 = tpu.iota {dimensions = array<i32: 0>} : vector<4x1xi32>
    %cst_4 = arith.constant 0.000000e+00 : f32
    %7 = vector.broadcast %cst_4 : f32 to vector<4x32xf32>
    %cst_5 = arith.constant 0.000000e+00 : f32
    %8 = vector.broadcast %cst_5 : f32 to vector<4x32xf32>
    %c0_i32 = arith.constant 0 : i32
    %9 = arith.subi %1, %c0_i32 : i32
    %10 = arith.addi %c0_i32, %9 : i32
    %c1_i32_6 = arith.constant 1 : i32
    %11:2 = scf.for %arg10 = %c0_i32 to %10 step %c1_i32_6 iter_args(%arg11 = %7, %arg12 = %8) -> (vector<4x32xf32>, vector<4x32xf32>)  : i32 {
      %c1_i32_13 = arith.constant 1 : i32
      %18 = arith.subi %1, %c1_i32_13 : i32
      %19 = arith.subi %18, %arg10 : i32
      %20 = arith.select %0, %19, %arg10 : i32
      %21 = arith.truncf %arg11 : vector<4x32xf32> to vector<4x32xbf16>
      %c0_14 = arith.constant 0 : index
      %c0_15 = arith.constant 0 : index
      %c0_16 = arith.constant 0 : index
      %22 = vector.load %arg5[%c0_14, %c0_15, %c0_16] : memref<1x32x128xbf16, #tpu.memory_space<vmem>>, vector<1x32x128xbf16>
      %23 = vector.shape_cast %22 : vector<1x32x128xbf16> to vector<32x128xbf16>
      %cst_17 = arith.constant dense<0.000000e+00> : vector<4x128xf32>
      %24 = tpu.matmul %21, %23, %cst_17 {dimension_numbers = #tpu.dot_dimension_numbers<[1], [0], [0], [1], [0, 0, 1, 1], [], []>} : vector<4x32xbf16>, vector<32x128xbf16>, vector<4x128xf32> -> vector<4x128xf32>
      %c0_i32_18 = arith.constant 0 : i32
      %25 = arith.addi %c0_i32_18, %20 : i32
      %26 = arith.index_cast %25 : i32 to index
      %c0_19 = arith.constant 0 : index
      %c0_20 = arith.constant 0 : index
      %27 = vector.load %arg3[%26, %c0_19, %c0_20] : memref<8x4x16xbf16, #tpu.memory_space<vmem>>, vector<1x4x16xbf16>
      %28 = vector.shape_cast %27 : vector<1x4x16xbf16> to vector<4x16xbf16>
      %c0_21 = arith.constant 0 : index
      %c0_22 = arith.constant 0 : index
      %c0_23 = arith.constant 0 : index
      %c0_24 = arith.constant 0 : index
      %29 = vector.load %arg4[%c0_21, %c0_22, %c0_23, %c0_24] : memref<1x1x16x128xbf16, #tpu.memory_space<vmem>>, vector<1x1x16x128xbf16>
      %30 = vector.shape_cast %29 : vector<1x1x16x128xbf16> to vector<16x128xbf16>
      %cst_25 = arith.constant dense<0.000000e+00> : vector<4x128xf32>
      %31 = tpu.matmul %28, %30, %cst_25 {dimension_numbers = #tpu.dot_dimension_numbers<[1], [0], [0], [1], [0, 0, 1, 1], [], []>} : vector<4x16xbf16>, vector<16x128xbf16>, vector<4x128xf32> -> vector<4x128xf32>
      %32 = arith.addf %24, %31 : vector<4x128xf32>
      %c0_26 = arith.constant 0 : index
      %c0_27 = arith.constant 0 : index
      %c0_28 = arith.constant 0 : index
      %33 = vector.load %arg6[%c0_26, %c0_27, %c0_28] : memref<1x1x128xf32, #tpu.memory_space<vmem>>, vector<1x1x128xf32>
      %34 = vector.shape_cast %33 : vector<1x1x128xf32> to vector<1x128xf32>
      %35 = vector.broadcast %34 : vector<1x128xf32> to vector<4x128xf32>
      %36 = arith.addf %32, %35 : vector<4x128xf32>
      %37 = vector.extract_strided_slice %36 {offsets = [0, 0], sizes = [4, 32], strides = [1, 1]} : vector<4x128xf32> to vector<4x32xf32>
      %38 = arith.negf %37 : vector<4x32xf32>
      %39 = math.exp %38 : vector<4x32xf32>
      %cst_29 = arith.constant 1.000000e+00 : f32
      %40 = vector.broadcast %cst_29 : f32 to vector<4x32xf32>
      %41 = arith.addf %40, %39 : vector<4x32xf32>
      %42 = arith.divf %40, %41 : vector<4x32xf32>
      %43 = vector.extract_strided_slice %36 {offsets = [0, 32], sizes = [4, 32], strides = [1, 1]} : vector<4x128xf32> to vector<4x32xf32>
      %44 = arith.negf %43 : vector<4x32xf32>
      %45 = math.exp %44 : vector<4x32xf32>
      %cst_30 = arith.constant 1.000000e+00 : f32
      %46 = vector.broadcast %cst_30 : f32 to vector<4x32xf32>
      %47 = arith.addf %46, %45 : vector<4x32xf32>
      %48 = arith.divf %46, %47 : vector<4x32xf32>
      %49 = vector.extract_strided_slice %36 {offsets = [0, 64], sizes = [4, 32], strides = [1, 1]} : vector<4x128xf32> to vector<4x32xf32>
      %50 = math.tanh %49 : vector<4x32xf32>
      %51 = vector.extract_strided_slice %36 {offsets = [0, 96], sizes = [4, 32], strides = [1, 1]} : vector<4x128xf32> to vector<4x32xf32>
      %52 = arith.negf %51 : vector<4x32xf32>
      %53 = math.exp %52 : vector<4x32xf32>
      %cst_31 = arith.constant 1.000000e+00 : f32
      %54 = vector.broadcast %cst_31 : f32 to vector<4x32xf32>
      %55 = arith.addf %54, %53 : vector<4x32xf32>
      %56 = arith.divf %54, %55 : vector<4x32xf32>
      %57 = arith.mulf %48, %arg12 : vector<4x32xf32>
      %58 = arith.mulf %42, %50 : vector<4x32xf32>
      %59 = arith.addf %57, %58 : vector<4x32xf32>
      %60 = math.tanh %59 : vector<4x32xf32>
      %61 = arith.mulf %56, %60 : vector<4x32xf32>
      %62 = arith.index_cast %20 : i32 to index
      %63 = memref.load %arg2[%62] : memref<8xi32, #tpu.memory_space<smem>>
      %64 = vector.broadcast %63 : i32 to vector<4x1xi32>
      %65 = arith.cmpi slt, %6, %64 : vector<4x1xi32>
      %66 = vector.shape_cast %65 : vector<4x1xi1> to vector<4x1xi1>
      %67 = vector.broadcast %66 : vector<4x1xi1> to vector<4x32xi1>
      %68 = arith.select %67, %59, %arg12 : vector<4x32xi1>, vector<4x32xf32>
      %69 = vector.shape_cast %65 : vector<4x1xi1> to vector<4x1xi1>
      %70 = vector.broadcast %69 : vector<4x1xi1> to vector<4x32xi1>
      %71 = arith.select %70, %61, %arg11 : vector<4x32xi1>, vector<4x32xf32>
      %cst_32 = arith.constant 0.000000e+00 : f32
      %72 = vector.shape_cast %65 : vector<4x1xi1> to vector<4x1xi1>
      %73 = vector.broadcast %72 : vector<4x1xi1> to vector<4x32xi1>
      %74 = vector.broadcast %cst_32 : f32 to vector<4x32xf32>
      %75 = arith.select %73, %61, %74 : vector<4x32xi1>, vector<4x32xf32>
      %76 = arith.truncf %75 : vector<4x32xf32> to vector<4x32xbf16>
      %c0_33 = arith.constant 0 : index
      %77 = arith.index_cast %20 : i32 to index
      %c0_34 = arith.constant 0 : index
      %c0_35 = arith.constant 0 : index
      %78 = vector.load %arg7[%c0_33, %77, %c0_34, %c0_35] : memref<1x8x4x32xbf16, #tpu.memory_space<vmem>>, vector<1x1x4x32xbf16>
      %79 = vector.shape_cast %78 : vector<1x1x4x32xbf16> to vector<4x32xbf16>
      %80 = vector.shape_cast %76 : vector<4x32xbf16> to vector<1x1x4x32xbf16>
      tpu.vector_store %arg7[%c0_33, %77, %c0_34, %c0_35], %80 {strides = array<i32>} : memref<1x8x4x32xbf16, #tpu.memory_space<vmem>>, vector<1x1x4x32xbf16>,
      scf.yield %71, %68 : vector<4x32xf32>, vector<4x32xf32>
    }
    %c0_7 = arith.constant 0 : index
    %c0_8 = arith.constant 0 : index
    %c0_9 = arith.constant 0 : index
    %12 = vector.load %arg8[%c0_7, %c0_8, %c0_9] : memref<1x4x32xf32, #tpu.memory_space<vmem>>, vector<1x4x32xf32>
    %13 = vector.shape_cast %12 : vector<1x4x32xf32> to vector<4x32xf32>
    %14 = vector.shape_cast %11#0 : vector<4x32xf32> to vector<1x4x32xf32>
    tpu.vector_store %arg8[%c0_7, %c0_8, %c0_9], %14 {strides = array<i32>} : memref<1x4x32xf32, #tpu.memory_space<vmem>>, vector<1x4x32xf32>,
    %c0_10 = arith.constant 0 : index
    %c0_11 = arith.constant 0 : index
    %c0_12 = arith.constant 0 : index
    %15 = vector.load %arg9[%c0_10, %c0_11, %c0_12] : memref<1x4x32xf32, #tpu.memory_space<vmem>>, vector<1x4x32xf32>
    %16 = vector.shape_cast %15 : vector<1x4x32xf32> to vector<4x32xf32>
    %17 = vector.shape_cast %11#1 : vector<4x32xf32> to vector<1x4x32xf32>
    tpu.vector_store %arg9[%c0_10, %c0_11, %c0_12], %17 {strides = array<i32>} : memref<1x4x32xf32, #tpu.memory_space<vmem>>, vector<1x4x32xf32>,
    return
  }
  func.func @transform_0(%arg0: i32, %arg1: memref<4xi32, #tpu.memory_space<smem>>, %arg2: memref<8xi32, #tpu.memory_space<smem>>) -> (i32, i32, i32) {
    %c0_i32 = arith.constant 0 : i32
    %c0_i32_0 = arith.constant 0 : i32
    %c0_i32_1 = arith.constant 0 : i32
    %c0_i32_2 = arith.constant 0 : i32
    return %c0_i32, %c0_i32_0, %c0_i32_1 : i32, i32, i32
  }
  func.func @transform_1(%arg0: i32, %arg1: memref<4xi32, #tpu.memory_space<smem>>, %arg2: memref<8xi32, #tpu.memory_space<smem>>) -> (i32, i32, i32, i32) {
    %c0_i32 = arith.constant 0 : i32
    %c0_i32_0 = arith.constant 0 : i32
    %c0_i32_1 = arith.constant 0 : i32
    %c0_i32_2 = arith.constant 0 : i32
    return %arg0, %c0_i32, %c0_i32_0, %c0_i32_1 : i32, i32, i32, i32
  }
  func.func @transform_2(%arg0: i32, %arg1: memref<4xi32, #tpu.memory_space<smem>>, %arg2: memref<8xi32, #tpu.memory_space<smem>>) -> (i32, i32, i32) {
    %c0_i32 = arith.constant 0 : i32
    %c0_i32_0 = arith.constant 0 : i32
    %c0_i32_1 = arith.constant 0 : i32
    return %arg0, %c0_i32, %c0_i32_0 : i32, i32, i32
  }
  func.func @transform_3(%arg0: i32, %arg1: memref<4xi32, #tpu.memory_space<smem>>, %arg2: memref<8xi32, #tpu.memory_space<smem>>) -> (i32, i32, i32) {
    %c0_i32 = arith.constant 0 : i32
    %c0_i32_0 = arith.constant 0 : i32
    %c0_i32_1 = arith.constant 0 : i32
    return %arg0, %c0_i32, %c0_i32_0 : i32, i32, i32
  }
  func.func @transform_4(%arg0: i32, %arg1: memref<4xi32, #tpu.memory_space<smem>>, %arg2: memref<8xi32, #tpu.memory_space<smem>>) -> (i32, i32, i32, i32) {
    %c0_i32 = arith.constant 0 : i32
    %c0_i32_0 = arith.constant 0 : i32
    %c0_i32_1 = arith.constant 0 : i32
    %c0_i32_2 = arith.constant 0 : i32
    return %arg0, %c0_i32, %c0_i32_0, %c0_i32_1 : i32, i32, i32, i32
  }
  func.func @transform_5(%arg0: i32, %arg1: memref<4xi32, #tpu.memory_space<smem>>, %arg2: memref<8xi32, #tpu.memory_space<smem>>) -> (i32, i32, i32) {
    %c0_i32 = arith.constant 0 : i32
    %c0_i32_0 = arith.constant 0 : i32
    %c0_i32_1 = arith.constant 0 : i32
    return %arg0, %c0_i32, %c0_i32_0 : i32, i32, i32
  }
  func.func @transform_6(%arg0: i32, %arg1: memref<4xi32, #tpu.memory_space<smem>>, %arg2: memref<8xi32, #tpu.memory_space<smem>>) -> (i32, i32, i32) {
    %c0_i32 = arith.constant 0 : i32
    %c0_i32_0 = arith.constant 0 : i32
    %c0_i32_1 = arith.constant 0 : i32
    return %arg0, %c0_i32, %c0_i32_0 : i32, i32, i32
  }
}

</mosaic_0001>

<llo_original>
// kernel: tpu_custom_call.1
$region0: #{tpu_custom_call.1}
  #allocation0 [shape = 'u32[]', space=smem, size = 0x4, offset = 0x4, fixed_abs, tag = 'smem constant byte address 0x4 - core index']
  #allocation1 [shape = 'u32[144,128]{1,0:T(1,128)}', space=vmem, size = 0x12000, scoped, tag = 'internal scratch']
  #allocation2 [shape = 's32[1]{0}', space=sflag, size = 0x4, scoped, tag = 'scoped memory for tpu_custom_call.1']
  #allocation3 [shape = 'u8[512]{0}', space=smem, size = 0x200, scoped, tag = 'prefetched SMEM operand 0']
  #allocation4 [shape = 'u8[512]{0}', space=smem, size = 0x200, scoped, tag = 'prefetched SMEM operand 1']
  %s0 = inlined_call_operand.hbm [shape: s32[4], index: 0, kind: input, shape index: {}]
  %s1 = inlined_call_operand.vmem [shape: s32[8], index: 1, kind: input, shape index: {}]
  %s2 = inlined_call_operand.hbm [shape: bf16[8,4,16], index: 2, kind: input, shape index: {}]
  %s3 = inlined_call_operand.hbm [shape: bf16[2,1,16,128], index: 3, kind: input, shape index: {}]
  %s4 = inlined_call_operand.hbm [shape: bf16[2,32,128], index: 4, kind: input, shape index: {}]
  %s5 = inlined_call_operand.vmem [shape: f32[2,1,128], index: 5, kind: input, shape index: {}]
  %s6 = inlined_call_operand.hbm [shape: bf16[2,8,4,32], index: 6, kind: output, shape index: {0}]
  %s7 = inlined_call_operand.hbm [shape: f32[2,4,32], index: 7, kind: output, shape index: {1}]
  %s8 = inlined_call_operand.hbm [shape: f32[2,4,32], index: 8, kind: output, shape index: {2}]
  %9 = xla_tuple %s6, %s7, %s8
  %s10 = sld [smem:[#allocation0]]
  $region84: #{tpu_custom_call.1} parent=0
    _
  %s12 = ssub.s32 1, %s10
  %s13 = scalar_select 0, %s12, %s10
  %15 = dma.hbm_to_smem %s0, 16, [#allocation3], [#allocation2]
  %s16 = sshll.u32 %s1, 4
  %s17 = int_to_ptr.vmem [resolvable:$true] %s16
  %19 = dma.vmem_to_smem %s17, 16, [#allocation4], [#allocation2]
  %20 = dma.done [#allocation2], 32
  %21 = sfence
  $region1: #{tpu_custom_call.1} parent=0
    #allocation5 [shape = 'u8[8192]{0}', space=vmem, size = 0x2000, scoped, tag = 'input window, operand 2, single buffered']
    #allocation6 [shape = 's32[2]{0}', space=sflag, size = 0x8, scoped, tag = 'scoped memory for tpu_custom_call.1']
    #allocation7 [shape = 's32[2]{0}', space=sflag, size = 0x8, scoped, tag = 'scoped memory for tpu_custom_call.1']
    #allocation8 [shape = 'u8[8192]{0}', space=vmem, size = 0x2000, scoped, tag = 'input window, operand 3']
    #allocation9 [shape = 's32[2]{0}', space=sflag, size = 0x8, scoped, tag = 'scoped memory for tpu_custom_call.1']
    #allocation10 [shape = 'u8[16384]{0}', space=vmem, size = 0x4000, scoped, tag = 'input window, operand 4']
    #allocation11 [shape = 'u8[16384]{0}', space=vmem, size = 0x4000, scoped, tag = 'output window, operand 0']
    #allocation12 [shape = 'u8[4096]{0}', space=vmem, size = 0x1000, scoped, tag = 'output window, operand 1']
    #allocation13 [shape = 's32[2]{0}', space=sflag, size = 0x8, scoped, tag = 'scoped memory for tpu_custom_call.1']
    #allocation14 [shape = 'u8[4096]{0}', space=vmem, size = 0x1000, scoped, tag = 'output window, operand 2']
    %22 = vsyncpa [#allocation6], 0
    %23 = vsyncpa [#allocation9], 0
    %s24 = scalar_lea.sflag [#allocation9], 1
    %25 = vsyncpa %s24, 0
    %26 = vsyncpa [#allocation7], 0
    %s27 = scalar_lea.sflag [#allocation7], 1
    %28 = vsyncpa %s27, 0
    %29 = vsyncpa [#allocation13], 0
    %s30 = scalar_lea.sflag [#allocation13], 1
    %31 = vsyncpa %s30, 0
    loop: start=0, step=1, limit=4
    $region2: #{tpu_custom_call.1} parent=1 // loop_pre_header
      _
    $region3: #{tpu_custom_call.1} parent=1 // loop_header
      %s33 = sphi 0, %s37
      %p34 = scmp.ge.s32.totalorder %s33, 4
      %s41 = sphi 0, %s41
      %s43 = sphi 0, %s41
      %s44 = sphi 0, %s43
      %s58 = sphi 0, %s44
      %s64 = sphi 0, %s66
      %s67 = sphi 0, %s64
      %s68 = sphi 0, %s67
      %s84 = sphi 0, %s68
      %s90 = sphi 0, %s92
      %s93 = sphi 0, %s90
      %s94 = sphi 0, %s93
      %s110 = sphi 0, %s94
      %s116 = sphi 0, %s118
      %s119 = sphi 0, %s116
      %s120 = sphi 0, %s119
      %s136 = sphi 0, %s120
      %s142 = sphi 0, %s144
      %s145 = sphi 0, %s142
      %s146 = sphi 0, %s145
      %s162 = sphi 0, %s146
      %s168 = sphi 0, %s170
      %s171 = sphi 0, %s168
      %s172 = sphi 0, %s171
      %s188 = sphi 0, %s172
      %s194 = sphi 0, %s196
      %s197 = sphi 0, %s194
      %s198 = sphi 0, %s197
      %s214 = sphi 0, %s198
    $region4: #{tpu_custom_call.1} parent=1 // loop_header_branch
      %36 = sbr.rel (%p34) target = $region8
    $region5: #{tpu_custom_call.1} parent=1 // loop_body
      %s38 = ssub.s32 %s33, 1
      %s39 = ssub.s32 %s33, 2
      %s40 = sadd.s32 %s33, 1
      %s42 = sadd.s32 %s41, 1
      %p45 = scmp.eq.s32.totalorder %s33, 1
      %p46 = scmp.ne.s32.totalorder %s41, %s43
      %p47 = scmp.eq.s32.totalorder %s33, 0
      %p48 = por %p46, %p47
      %p49 = scmp.ne.s32.totalorder %s41, %s43
      %p50 = scmp.eq.s32.totalorder %s38, 1
      %p51 = por %p49, %p50
      %p52 = scmp.ne.s32.totalorder %s43, %s44
      %p53 = scmp.eq.s32.totalorder %s38, 0
      %p54 = por %p52, %p53
      %p55 = scmp.ne.s32.totalorder %s43, %s44
      %p56 = scmp.eq.s32.totalorder %s39, 1
      %p57 = por %p55, %p56
      %p59 = scmp.ne.s32.totalorder %s44, %s58
      %p60 = scmp.eq.s32.totalorder %s39, 0
      %p61 = por %p59, %p60
      %s62 = ssub.s32 %s33, %s40
      %p63 = scmp.eq.s32.totalorder %s62, 0
      %s65 = sadd.s32 %s64, 1
      %s66 = scalar_select %p63, %s64, %s65
      %p69 = pneg %p63
      %p70 = scmp.eq.s32.totalorder %s33, 1
      %p71 = por %p69, %p70
      %p72 = scmp.ne.s32.totalorder %s64, %s67
      %p73 = scmp.eq.s32.totalorder %s33, 0
      %p74 = por %p72, %p73
      %p75 = scmp.ne.s32.totalorder %s64, %s67
      %p76 = scmp.eq.s32.totalorder %s38, 1
      %p77 = por %p75, %p76
      %p78 = scmp.ne.s32.totalorder %s67, %s68
      %p79 = scmp.eq.s32.totalorder %s38, 0
      %p80 = por %p78, %p79
      %p81 = scmp.ne.s32.totalorder %s67, %s68
      %p82 = scmp.eq.s32.totalorder %s39, 1
      %p83 = por %p81, %p82
      %p85 = scmp.ne.s32.totalorder %s68, %s84
      %p86 = scmp.eq.s32.totalorder %s39, 0
      %p87 = por %p85, %p86
      %s88 = ssub.s32 %s33, %s40
      %p89 = scmp.eq.s32.totalorder %s88, 0
      %s91 = sadd.s32 %s90, 1
      %s92 = scalar_select %p89, %s90, %s91
      %p95 = pneg %p89
      %p96 = scmp.eq.s32.totalorder %s33, 1
      %p97 = por %p95, %p96
      %p98 = scmp.ne.s32.totalorder %s90, %s93
      %p99 = scmp.eq.s32.totalorder %s33, 0
      %p100 = por %p98, %p99
      %p101 = scmp.ne.s32.totalorder %s90, %s93
      %p102 = scmp.eq.s32.totalorder %s38, 1
      %p103 = por %p101, %p102
      %p104 = scmp.ne.s32.totalorder %s93, %s94
      %p105 = scmp.eq.s32.totalorder %s38, 0
      %p106 = por %p104, %p105
      %p107 = scmp.ne.s32.totalorder %s93, %s94
      %p108 = scmp.eq.s32.totalorder %s39, 1
      %p109 = por %p107, %p108
      %p111 = scmp.ne.s32.totalorder %s94, %s110
      %p112 = scmp.eq.s32.totalorder %s39, 0
      %p113 = por %p111, %p112
      %s114 = ssub.s32 %s33, %s40
      %p115 = scmp.eq.s32.totalorder %s114, 0
      %s117 = sadd.s32 %s116, 1
      %s118 = scalar_select %p115, %s116, %s117
      %p121 = pneg %p115
      %p122 = scmp.eq.s32.totalorder %s33, 1
      %p123 = por %p121, %p122
      %p124 = scmp.ne.s32.totalorder %s116, %s119
      %p125 = scmp.eq.s32.totalorder %s33, 0
      %p126 = por %p124, %p125
      %p127 = scmp.ne.s32.totalorder %s116, %s119
      %p128 = scmp.eq.s32.totalorder %s38, 1
      %p129 = por %p127, %p128
      %p130 = scmp.ne.s32.totalorder %s119, %s120
      %p131 = scmp.eq.s32.totalorder %s38, 0
      %p132 = por %p130, %p131
      %p133 = scmp.ne.s32.totalorder %s119, %s120
      %p134 = scmp.eq.s32.totalorder %s39, 1
      %p135 = por %p133, %p134
      %p137 = scmp.ne.s32.totalorder %s120, %s136
      %p138 = scmp.eq.s32.totalorder %s39, 0
      %p139 = por %p137, %p138
      %s140 = ssub.s32 %s33, %s40
      %p141 = scmp.eq.s32.totalorder %s140, 0
      %s143 = sadd.s32 %s142, 1
      %s144 = scalar_select %p141, %s142, %s143
      %p147 = pneg %p141
      %p148 = scmp.eq.s32.totalorder %s33, 1
      %p149 = por %p147, %p148
      %p150 = scmp.ne.s32.totalorder %s142, %s145
      %p151 = scmp.eq.s32.totalorder %s33, 0
      %p152 = por %p150, %p151
      %p153 = scmp.ne.s32.totalorder %s142, %s145
      %p154 = scmp.eq.s32.totalorder %s38, 1
      %p155 = por %p153, %p154
      %p156 = scmp.ne.s32.totalorder %s145, %s146
      %p157 = scmp.eq.s32.totalorder %s38, 0
      %p158 = por %p156, %p157
      %p159 = scmp.ne.s32.totalorder %s145, %s146
      %p160 = scmp.eq.s32.totalorder %s39, 1
      %p161 = por %p159, %p160
      %p163 = scmp.ne.s32.totalorder %s146, %s162
      %p164 = scmp.eq.s32.totalorder %s39, 0
      %p165 = por %p163, %p164
      %s166 = ssub.s32 %s33, %s40
      %p167 = scmp.eq.s32.totalorder %s166, 0
      %s169 = sadd.s32 %s168, 1
      %s170 = scalar_select %p167, %s168, %s169
      %p173 = pneg %p167
      %p174 = scmp.eq.s32.totalorder %s33, 1
      %p175 = por %p173, %p174
      %p176 = scmp.ne.s32.totalorder %s168, %s171
      %p177 = scmp.eq.s32.totalorder %s33, 0
      %p178 = por %p176, %p177
      %p179 = scmp.ne.s32.totalorder %s168, %s171
      %p180 = scmp.eq.s32.totalorder %s38, 1
      %p181 = por %p179, %p180
      %p182 = scmp.ne.s32.totalorder %s171, %s172
      %p183 = scmp.eq.s32.totalorder %s38, 0
      %p184 = por %p182, %p183
      %p185 = scmp.ne.s32.totalorder %s171, %s172
      %p186 = scmp.eq.s32.totalorder %s39, 1
      %p187 = por %p185, %p186
      %p189 = scmp.ne.s32.totalorder %s172, %s188
      %p190 = scmp.eq.s32.totalorder %s39, 0
      %p191 = por %p189, %p190
      %s192 = ssub.s32 %s33, %s40
      %p193 = scmp.eq.s32.totalorder %s192, 0
      %s195 = sadd.s32 %s194, 1
      %s196 = scalar_select %p193, %s194, %s195
      %p199 = pneg %p193
      %p200 = scmp.eq.s32.totalorder %s33, 1
      %p201 = por %p199, %p200
      %p202 = scmp.ne.s32.totalorder %s194, %s197
      %p203 = scmp.eq.s32.totalorder %s33, 0
      %p204 = por %p202, %p203
      %p205 = scmp.ne.s32.totalorder %s194, %s197
      %p206 = scmp.eq.s32.totalorder %s38, 1
      %p207 = por %p205, %p206
      %p208 = scmp.ne.s32.totalorder %s197, %s198
      %p209 = scmp.eq.s32.totalorder %s38, 0
      %p210 = por %p208, %p209
      %p211 = scmp.ne.s32.totalorder %s197, %s198
      %p212 = scmp.eq.s32.totalorder %s39, 1
      %p213 = por %p211, %p212
      %p215 = scmp.ne.s32.totalorder %s198, %s214
      %p216 = scmp.eq.s32.totalorder %s39, 0
      %p217 = por %p215, %p216
      %p218 = scmp.le.s32.totalorder 1, %s33
      %p219 = scmp.lt.s32.totalorder %s33, 3
      %p220 = pnand %p218, %p219
      %p221 = pneg %p220
      // Predicated region
      $region9: #{tpu_custom_call.1} parent=5 // pred_check
        _
      $region10: #{tpu_custom_call.1} parent=5 // pred_check_branch
        %223 = sbr.rel (%p220) target = $region12
      $region11: #{tpu_custom_call.1} parent=5 // pred_region
        %s224 = ssub.s32 %s33, 1
        // Predicated region
        $region13: #{tpu_custom_call.1} parent=11 // pred_check
          %p225 = pneg %p54
        $region14: #{tpu_custom_call.1} parent=11 // pred_check_branch
          %227 = sbr.rel (%p225) target = $region16
        $region15: #{tpu_custom_call.1} parent=11 // pred_region
          %s229 = ssub.s32 256, 256
          %230 = vsyncadd [#allocation6], %s229
          %s231 = sshll.u32 [#allocation5], 4
          %s232 = int_to_ptr.vmem [resolvable:$true] %s231
          %237 = dma.hbm_to_vmem [thread:$0]  %s2, 256, %s232, [#allocation6], 32, 32, 2
        $region16: #{tpu_custom_call.1} parent=11 // pred_fallthru
          _
      $region12: #{tpu_custom_call.1} parent=5 // pred_fallthru
        _
      %p238 = scmp.lt.s32.totalorder %s33, 2
      // Predicated region
      $region17: #{tpu_custom_call.1} parent=5 // pred_check
        %p239 = pneg %p238
      $region18: #{tpu_custom_call.1} parent=5 // pred_check_branch
        %241 = sbr.rel (%p239) target = $region20
      $region19: #{tpu_custom_call.1} parent=5 // pred_region
        // Predicated region
        $region21: #{tpu_custom_call.1} parent=19 // pred_check
          %p242 = pneg %p74
        $region22: #{tpu_custom_call.1} parent=19 // pred_check_branch
          %244 = sbr.rel (%p242) target = $region24
        $region23: #{tpu_custom_call.1} parent=19 // pred_region
          %s245 = sand.u32 %s33, 1
          %s246 = scalar_lea.sflag [#allocation9], %s245
          %s247 = sand.u32 %s64, 1
          %s248 = smul.addr %s247, 8
          %s249 = scalar_lea.vmem [#allocation8], %s248
          %s251 = ssub.s32 128, 128
          %252 = vsyncadd %s246, %s251
          %s253 = smul.addr %s33, 2
          %s254 = smul.addr %s253, 64
          %s255 = scalar_lea.hbm %s3, %s254
          %s256 = sshll.u32 %s249, 4
          %s257 = int_to_ptr.vmem [resolvable:$true] %s256
          %262 = dma.hbm_to_vmem [thread:$0]  %s255, 128, %s257, %s246, 64, 64, 4
        $region24: #{tpu_custom_call.1} parent=19 // pred_fallthru
          _
        // Predicated region
        $region25: #{tpu_custom_call.1} parent=19 // pred_check
          %p263 = pneg %p100
        $region26: #{tpu_custom_call.1} parent=19 // pred_check_branch
          %265 = sbr.rel (%p263) target = $region28
        $region27: #{tpu_custom_call.1} parent=19 // pred_region
          %s266 = sand.u32 %s33, 1
          %s267 = scalar_lea.sflag [#allocation9], %s266
          %s268 = sand.u32 %s90, 1
          %s269 = smul.addr %s268, 16
          %s270 = scalar_lea.vmem [#allocation10], %s269
          %s272 = ssub.s32 256, 256
          %273 = vsyncadd %s267, %s272
          %s274 = smul.addr %s33, 4
          %s275 = smul.addr %s274, 64
          %s276 = scalar_lea.hbm %s4, %s275
          %s277 = sshll.u32 %s270, 4
          %s278 = int_to_ptr.vmem [resolvable:$true] %s277
          %283 = dma.hbm_to_vmem [thread:$0]  %s276, 256, %s278, %s267, 64, 64, 4
        $region28: #{tpu_custom_call.1} parent=19 // pred_fallthru
          _
        // Predicated region
        $region29: #{tpu_custom_call.1} parent=19 // pred_check
          %p284 = pneg %p126
        $region30: #{tpu_custom_call.1} parent=19 // pred_check_branch
          %286 = sbr.rel (%p284) target = $region32
        $region31: #{tpu_custom_call.1} parent=19 // pred_region
          %p287 = scmp.lt.s32.totalorder %s33, 1
          %s288 = scalar_select %p287, %s33, 1
          %s289 = scalar_lea.vmem %s5, %s288
        $region32: #{tpu_custom_call.1} parent=19 // pred_fallthru
          _
      $region20: #{tpu_custom_call.1} parent=5 // pred_fallthru
        _
      %p290 = scmp.le.s32.totalorder 1, %s33
      %p291 = scmp.lt.s32.totalorder %s33, 3
      %p292 = pnand %p290, %p291
      %p293 = pneg %p292
      // Predicated region
      $region33: #{tpu_custom_call.1} parent=5 // pred_check
        _
      $region34: #{tpu_custom_call.1} parent=5 // pred_check_branch
        %295 = sbr.rel (%p292) target = $region36
      $region35: #{tpu_custom_call.1} parent=5 // pred_region
        %s296 = ssub.s32 %s33, 1
        // Predicated region
        $region37: #{tpu_custom_call.1} parent=35 // pred_check
          %p297 = pneg %p54
        $region38: #{tpu_custom_call.1} parent=35 // pred_check_branch
          %299 = sbr.rel (%p297) target = $region40
        $region39: #{tpu_custom_call.1} parent=35 // pred_region
          %300 = dma.done [#allocation6], 256
        $region40: #{tpu_custom_call.1} parent=35 // pred_fallthru
          _
        %s301 = sand.u32 %s38, 1
        %s302 = scalar_lea.sflag [#allocation9], %s301
        %s303 = sand.u32 %s67, 1
        %s304 = smul.addr %s303, 8
        %s305 = scalar_lea.vmem [#allocation8], %s304
        // Predicated region
        $region41: #{tpu_custom_call.1} parent=35 // pred_check
          %p306 = pneg %p80
        $region42: #{tpu_custom_call.1} parent=35 // pred_check_branch
          %308 = sbr.rel (%p306) target = $region44
        $region43: #{tpu_custom_call.1} parent=35 // pred_region
          %309 = dma.done %s302, 128
        $region44: #{tpu_custom_call.1} parent=35 // pred_fallthru
          _
        %s310 = sand.u32 %s38, 1
        %s311 = scalar_lea.sflag [#allocation9], %s310
        %s312 = sand.u32 %s93, 1
        %s313 = smul.addr %s312, 16
        %s314 = scalar_lea.vmem [#allocation10], %s313
        // Predicated region
        $region45: #{tpu_custom_call.1} parent=35 // pred_check
          %p315 = pneg %p106
        $region46: #{tpu_custom_call.1} parent=35 // pred_check_branch
          %317 = sbr.rel (%p315) target = $region48
        $region47: #{tpu_custom_call.1} parent=35 // pred_region
          %318 = dma.done %s311, 256
        $region48: #{tpu_custom_call.1} parent=35 // pred_fallthru
          _
        %p319 = pneg %p54
        %p320 = pneg %p51
        %s321 = sand.u32 %s38, 1
        %s322 = scalar_lea.sflag [#allocation9], %s321
        %s323 = sand.u32 %s67, 1
        %s324 = smul.addr %s323, 8
        %s325 = scalar_lea.vmem [#allocation8], %s324
        %p326 = pneg %p80
        %p327 = pneg %p77
        %s328 = sand.u32 %s38, 1
        %s329 = scalar_lea.sflag [#allocation9], %s328
        %s330 = sand.u32 %s93, 1
        %s331 = smul.addr %s330, 16
        %s332 = scalar_lea.vmem [#allocation10], %s331
        %p333 = pneg %p106
        %p334 = pneg %p103
        %p335 = scmp.lt.s32.totalorder %s38, 1
        %s336 = scalar_select %p335, %s38, 1
        %s337 = scalar_lea.vmem %s5, %s336
        %p338 = pneg %p132
        %p339 = pneg %p129
        %p340 = pneg %p158
        %p341 = pneg %p155
        %s342 = sand.u32 %s145, 1
        %s343 = scalar_lea.sflag [#allocation7], %s342
        %s344 = sand.u32 %s145, 1
        %s345 = smul.addr %s344, 16
        %s346 = scalar_lea.vmem [#allocation11], %s345
        %p347 = pneg %p184
        %p348 = pneg %p181
        %s349 = sand.u32 %s38, 1
        %s350 = scalar_lea.sflag [#allocation13], %s349
        %s351 = sand.u32 %s171, 1
        %s352 = smul.addr %s351, 4
        %s353 = scalar_lea.vmem [#allocation12], %s352
        %p354 = pneg %p210
        %p355 = pneg %p207
        %s356 = sand.u32 %s38, 1
        %s357 = scalar_lea.sflag [#allocation13], %s356
        %s358 = sand.u32 %s197, 1
        %s359 = smul.addr %s358, 4
        %s360 = scalar_lea.vmem [#allocation14], %s359
        %p361 = scmp.lt.s32.totalorder %s38, 1
        %s362 = scalar_select %p361, %s38, 1
        %s363 = scalar_lea.vmem %s5, %s362
        %p365 = scmp.eq.s32.totalorder %s38, 1
        %s366 = sld [smem:[#allocation3]]
        %vm367 = vcmask 254976
        %368 = vst.msk [vmem:[%s346] sm:$0x3] %vm367, 0
        %369 = vst.msk [vmem:[%s346 + $0x2] sm:$0x3] %vm367, 0
        %370 = vst.msk [vmem:[%s346 + $0x4] sm:$0x3] %vm367, 0
        %371 = vst.msk [vmem:[%s346 + $0x6] sm:$0x3] %vm367, 0
        %372 = vst.msk [vmem:[%s346 + $0x8] sm:$0x3] %vm367, 0
        %373 = vst.msk [vmem:[%s346 + $0xa] sm:$0x3] %vm367, 0
        %374 = vst.msk [vmem:[%s346 + $0xc] sm:$0x3] %vm367, 0
        %375 = vst.msk [vmem:[%s346 + $0xe] sm:$0x3] %vm367, 0
        %v376 = vlaneseq
        %v377 = vshrl.u32 %v376, 7
        // While loop
        $region49: #{tpu_custom_call.1} parent=35 // loop_pre_header
          _
        $region50: #{tpu_custom_call.1} parent=35 // loop_header
          %s379 = sphi 0, %s381
          %p380 = scmp.ge.s32.totalorder %s379, %s366
          %v384 = vphi 0.0, %v546
          %v385 = vphi 0.0, %v545
        $region51: #{tpu_custom_call.1} parent=35 // loop_header_branch
          %383 = sbr.rel (%p380) target = $region55
        $region52: #{tpu_custom_call.1} parent=35 // loop_body
          %s386 = ssub.s32 %s366, 1
          %s387 = ssub.s32 %s386, %s379
          %s388 = scalar_select %p365, %s387, %s379
          %v389 = vpack.c.bf16 %v384, %v384
          %v390 = vld [vmem:[%s314] sm:$0xf]
          %v391 = vld [vmem:[%s314 + $0x4] sm:$0xf]
          %v392 = vld [vmem:[%s314 + $0x8] sm:$0xf]
          %v393 = vld [vmem:[%s314 + $0xc] sm:$0xf]
          %s394 = smul.addr %s388, 2
          %s395 = scalar_lea.vmem [#allocation5], %s394
          %v396 = vld [vmem:[%s395] sm:$0x3]
          %v397 = vld [vmem:[%s305] sm:$0xf]
          %v398 = vld [vmem:[%s305 + $0x4] sm:$0xf]
          %v401 = vunpack.c.l.b16 %v397
          %v402 = vunpack.c.l.b16 %v398
          %v403 = vpack.c.b16 %v402, %v401
          %vm405 = vcmask 130048
          %v407 = vsel %vm405, %v396, 0
          %409 = vmatprep.subr.bf16.mxu0 0
          %410 = vmatpush1.bf16.msra.mxu0 %v403
          %411 = vmatprep.subr.bf16.mxu0 0
          %412 = vmatpush1.bf16.msra.mxu0 0
          %413 = vmatprep.subr.bf16.mxu0 0
          %414 = vmatpush1.bf16.msra.mxu0 0
          %415 = vmatprep.subr.bf16.mxu0 0
          %416 = vmatpush1.bf16.msra.mxu0 0
          %417 = vmatprep.subr.bf16.mxu0 0
          %418 = vmatpush1.bf16.msra.mxu0 0
          %419 = vmatprep.subr.bf16.mxu0 0
          %420 = vmatpush1.bf16.msra.mxu0 0
          %421 = vmatprep.subr.bf16.mxu0 0
          %422 = vmatpush1.bf16.msra.mxu0 0
          %423 = vmatprep.subr.bf16.mxu0 0
          %424 = vmatpush1.bf16.msra.mxu0 0
          %425 = vmatprep.subr.bf16.mxu0 0
          %426 = vmatpush1.bf16.msra.mxu0 0
          %427 = vmatprep.subr.bf16.mxu0 0
          %428 = vmatpush1.bf16.msra.mxu0 0
          %429 = vmatprep.subr.bf16.mxu0 0
          %430 = vmatpush1.bf16.msra.mxu0 0
          %431 = vmatprep.subr.bf16.mxu0 0
          %432 = vmatpush1.bf16.msra.mxu0 0
          %433 = vmatprep.subr.bf16.mxu0 0
          %434 = vmatpush1.bf16.msra.mxu0 0
          %435 = vmatprep.subr.bf16.mxu0 0
          %436 = vmatpush1.bf16.msra.mxu0 0
          %437 = vmatprep.subr.bf16.mxu0 0
          %438 = vmatpush1.bf16.msra.mxu0 0
          %439 = vmatprep.subr.bf16.mxu0 0
          %440 = vmatpush1.bf16.msra.mxu0 0
          %441 = vmatprep.mubr.bf16.mxu0 0
          %442 = vmatmul.mubr.bf16.gmra.mrb[0].mxu0 %v407
          %v443 = vpop.f32.mrb[0].mxu0
          %v444 = vadd.f32 0.0, %v443
          %v445 = vpop.f32.mrb[0].mxu0
          %v446 = vpop.f32.mrb[0].mxu0
          %v447 = vpop.f32.mrb[0].mxu0
          %448 = vdwg.mxu0
          %450 = vrot.lane.b32.xlu0 %v389, 32
          %v451 = vpop.permute.xlu0 %450
          %v456 = vunpack.c.l.b16 %v390
          %v457 = vunpack.c.l.b16 %v391
          %v458 = vunpack.c.l.b16 %v392
          %v459 = vunpack.c.l.b16 %v393
          %v460 = vpack.c.b16 %v457, %v456
          %v461 = vpack.c.b16 %v459, %v458
          %vm464 = vcmask 261120
          %v466 = vsel %vm464, %v451, 0
          %468 = vmatprep.subr.bf16.mxu0 0
          %469 = vmatpush1.bf16.msra.mxu0 %v460
          %470 = vmatprep.subr.bf16.mxu0 0
          %471 = vmatpush1.bf16.msra.mxu0 %v461
          %472 = vmatprep.subr.bf16.mxu0 0
          %473 = vmatpush1.bf16.msra.mxu0 0
          %474 = vmatprep.subr.bf16.mxu0 0
          %475 = vmatpush1.bf16.msra.mxu0 0
          %476 = vmatprep.subr.bf16.mxu0 0
          %477 = vmatpush1.bf16.msra.mxu0 0
          %478 = vmatprep.subr.bf16.mxu0 0
          %479 = vmatpush1.bf16.msra.mxu0 0
          %480 = vmatprep.subr.bf16.mxu0 0
          %481 = vmatpush1.bf16.msra.mxu0 0
          %482 = vmatprep.subr.bf16.mxu0 0
          %483 = vmatpush1.bf16.msra.mxu0 0
          %484 = vmatprep.subr.bf16.mxu0 0
          %485 = vmatpush1.bf16.msra.mxu0 0
          %486 = vmatprep.subr.bf16.mxu0 0
          %487 = vmatpush1.bf16.msra.mxu0 0
          %488 = vmatprep.subr.bf16.mxu0 0
          %489 = vmatpush1.bf16.msra.mxu0 0
          %490 = vmatprep.subr.bf16.mxu0 0
          %491 = vmatpush1.bf16.msra.mxu0 0
          %492 = vmatprep.subr.bf16.mxu0 0
          %493 = vmatpush1.bf16.msra.mxu0 0
          %494 = vmatprep.subr.bf16.mxu0 0
          %495 = vmatpush1.bf16.msra.mxu0 0
          %496 = vmatprep.subr.bf16.mxu0 0
          %497 = vmatpush1.bf16.msra.mxu0 0
          %498 = vmatprep.subr.bf16.mxu0 0
          %499 = vmatpush1.bf16.msra.mxu0 0
          %500 = vmatprep.mubr.bf16.mxu0 0
          %501 = vmatmul.mubr.bf16.gmra.mrb[0].mxu0 %v466
          %v502 = vpop.f32.mrb[0].mxu0
          %v503 = vadd.f32 %v444, %v502
          %v504 = vpop.f32.mrb[0].mxu0
          %v505 = vpop.f32.mrb[0].mxu0
          %v506 = vpop.f32.mrb[0].mxu0
          %507 = vdwg.mxu0
          %v508 = vld [vmem:[%s363] sm:$0x1]
          %v510 = vlaneseq
          %v511 = vshrl.u32 %v510, 7
          %v512 = vsub.s32 0, %v511
          %v513 = vrot.slane %v508, %v512
          %v515 = vadd.f32 %v503, %v513
          %v516 = vxor.u32 %v515, 2147483648
          %v517 = vmul.f32 %v516, 1.442695
          %v518 = vpow.pop %v517
          %v519 = vadd.f32 %v518, 1.0
          %v520 = vrcp.pop %v519
          %v521 = vmul.f32 1.0, %v520
          %v522 = vtanh.pop %v515
          %v523 = vmul.f32 %v521, %v385
          %525 = vrot.lane.b32.xlu0 %v522, 64
          %v526 = vpop.permute.xlu0 %525
          %v528 = vmul.f32 %v521, %v526
          %530 = vrot.lane.b32.xlu0 %v528, 32
          %v531 = vpop.permute.xlu0 %530
          %v533 = vadd.f32 %v523, %v531
          %v534 = vtanh.pop %v533
          %536 = vrot.lane.b32.xlu0 %v534, 64
          %v537 = vpop.permute.xlu0 %536
          %v539 = vmul.f32 %v521, %v537
          %s540 = sld [smem:[#allocation4 + %s388]]
          %v541 = vstv %s540
          %vm542 = vcmp.lt.s32.totalorder %v377, %v541
          %v543 = vsel %vm542, 1, 0
          %vm544 = vcmp.eq.s32.totalorder %v543, 1
          %v545 = vsel %vm544, %v533, %v385
          %v546 = vsel %vm544, %v539, %v384
          %v547 = vsel %vm544, %v539, 0.0
          %v548 = vpack.c.bf16 %v547, %v547
          %v551 = vunpack.c.l.s4 1983009808
          %v552 = vunpack.c.0.s8 %v551
          %v553 = vlaneseq
          %v554 = vshrl.u32 %v553, 7
          %v555 = vsub.s32 %v552, %v554
          %v556 = vrot.slane %v548, %v555
          %557 = vrot.lane.b32.xlu0 %v556, 32
          %v558 = vpop.permute.xlu0 %557
          %s560 = smul.addr %s388, 2
          %s561 = scalar_lea.vmem %s346, %s560 [#allocation11]
          %562 = vst.msk [vmem:[%s561] sm:$0x3] %vm367, %v558
        $region53: #{tpu_custom_call.1} parent=35 // loop_footer
          %s381 = sadd.s32 %s379, 1
        $region54: #{tpu_custom_call.1} parent=35 // loop_footer_branch
          %378 = sbr.rel target = $region50
        $region55: #{tpu_custom_call.1} parent=35 // loop_exit
          _
        %564 = vrot.lane.b32.xlu0 %v384, 32
        %v565 = vpop.permute.xlu0 %564
        %vm567 = vcmask 257024
        %568 = vst.msk [vmem:[%s353] sm:$0xf] %vm567, %v565
        %570 = vrot.lane.b32.xlu0 %v385, 96
        %v571 = vpop.permute.xlu0 %570
        %573 = vst.msk [vmem:[%s360] sm:$0xf] %vm567, %v571
        %s574 = sand.u32 %s145, 1
        %s575 = scalar_lea.sflag [#allocation7], %s574
        %s576 = sand.u32 %s145, 1
        %s577 = smul.addr %s576, 16
        %s578 = scalar_lea.vmem [#allocation11], %s577
        %s579 = sand.u32 %s38, 1
        %s580 = scalar_lea.sflag [#allocation13], %s579
        %s581 = sand.u32 %s171, 1
        %s582 = smul.addr %s581, 4
        %s583 = scalar_lea.vmem [#allocation12], %s582
        %s584 = sand.u32 %s38, 1
        %s585 = scalar_lea.sflag [#allocation13], %s584
        %s586 = sand.u32 %s197, 1
        %s587 = smul.addr %s586, 4
        %s588 = scalar_lea.vmem [#allocation14], %s587
        // Predicated region
        $region56: #{tpu_custom_call.1} parent=35 // pred_check
          %p589 = pneg %p155
        $region57: #{tpu_custom_call.1} parent=35 // pred_check_branch
          %591 = sbr.rel (%p589) target = $region59
        $region58: #{tpu_custom_call.1} parent=35 // pred_region
          %s593 = ssub.s32 256, 256
          %594 = vsyncadd %s575, %s593
          %s595 = smul.addr %s38, 8
          %s596 = smul.addr %s595, 32
          %s597 = scalar_lea.hbm %s6, %s596
          %s598 = sshll.u32 %s578, 4
          %s599 = int_to_ptr.vmem [resolvable:$true] %s598
          %604 = dma.vmem_to_hbm [thread:$0]  %s599, 256, %s597, %s575, 32, 32, 2
        $region59: #{tpu_custom_call.1} parent=35 // pred_fallthru
          _
        // Predicated region
        $region60: #{tpu_custom_call.1} parent=35 // pred_check
          %p605 = pneg %p181
        $region61: #{tpu_custom_call.1} parent=35 // pred_check_branch
          %607 = sbr.rel (%p605) target = $region63
        $region62: #{tpu_custom_call.1} parent=35 // pred_region
          %s609 = ssub.s32 64, 64
          %610 = vsyncadd %s580, %s609
          %s611 = smul.addr %s38, 64
          %s612 = scalar_lea.hbm %s7, %s611
          %s614 = sshll.u32 %s583, 4
          %s615 = int_to_ptr.vmem [resolvable:$true] %s614
          %617 = dma.vmem_to_hbm [thread:$0]  %s615, 64, %s612, %s580
        $region63: #{tpu_custom_call.1} parent=35 // pred_fallthru
          _
        // Predicated region
        $region64: #{tpu_custom_call.1} parent=35 // pred_check
          %p618 = pneg %p207
        $region65: #{tpu_custom_call.1} parent=35 // pred_check_branch
          %620 = sbr.rel (%p618) target = $region67
        $region66: #{tpu_custom_call.1} parent=35 // pred_region
          %s622 = ssub.s32 64, 64
          %623 = vsyncadd %s585, %s622
          %s624 = smul.addr %s38, 64
          %s625 = scalar_lea.hbm %s8, %s624
          %s627 = sshll.u32 %s588, 4
          %s628 = int_to_ptr.vmem [resolvable:$true] %s627
          %630 = dma.vmem_to_hbm [thread:$0]  %s628, 64, %s625, %s585
        $region67: #{tpu_custom_call.1} parent=35 // pred_fallthru
          _
      $region36: #{tpu_custom_call.1} parent=5 // pred_fallthru
        _
      %p631 = scmp.le.s32.totalorder 2, %s33
      // Predicated region
      $region68: #{tpu_custom_call.1} parent=5 // pred_check
        %p632 = pneg %p631
      $region69: #{tpu_custom_call.1} parent=5 // pred_check_branch
        %634 = sbr.rel (%p632) target = $region71
      $region70: #{tpu_custom_call.1} parent=5 // pred_region
        %s635 = ssub.s32 %s33, 2
        // Predicated region
        $region72: #{tpu_custom_call.1} parent=70 // pred_check
          %p636 = pneg %p161
        $region73: #{tpu_custom_call.1} parent=70 // pred_check_branch
          %638 = sbr.rel (%p636) target = $region75
        $region74: #{tpu_custom_call.1} parent=70 // pred_region
          %s639 = sand.u32 %s146, 1
          %s640 = scalar_lea.sflag [#allocation7], %s639
          %s641 = sand.u32 %s146, 1
          %s642 = smul.addr %s641, 16
          %s643 = scalar_lea.vmem [#allocation11], %s642
          %644 = dma.done %s640, 256
        $region75: #{tpu_custom_call.1} parent=70 // pred_fallthru
          _
        // Predicated region
        $region76: #{tpu_custom_call.1} parent=70 // pred_check
          %p645 = pneg %p187
        $region77: #{tpu_custom_call.1} parent=70 // pred_check_branch
          %647 = sbr.rel (%p645) target = $region79
        $region78: #{tpu_custom_call.1} parent=70 // pred_region
          %s648 = sand.u32 %s39, 1
          %s649 = scalar_lea.sflag [#allocation13], %s648
          %s650 = sand.u32 %s172, 1
          %s651 = smul.addr %s650, 4
          %s652 = scalar_lea.vmem [#allocation12], %s651
          %653 = dma.done %s649, 64
        $region79: #{tpu_custom_call.1} parent=70 // pred_fallthru
          _
        // Predicated region
        $region80: #{tpu_custom_call.1} parent=70 // pred_check
          %p654 = pneg %p213
        $region81: #{tpu_custom_call.1} parent=70 // pred_check_branch
          %656 = sbr.rel (%p654) target = $region83
        $region82: #{tpu_custom_call.1} parent=70 // pred_region
          %s657 = sand.u32 %s39, 1
          %s658 = scalar_lea.sflag [#allocation13], %s657
          %s659 = sand.u32 %s198, 1
          %s660 = smul.addr %s659, 4
          %s661 = scalar_lea.vmem [#allocation14], %s660
          %662 = dma.done %s658, 64
        $region83: #{tpu_custom_call.1} parent=70 // pred_fallthru
          _
      $region71: #{tpu_custom_call.1} parent=5 // pred_fallthru
        _
    $region6: #{tpu_custom_call.1} parent=1 // loop_footer
      %s37 = sadd.s32 1, %s33
    $region7: #{tpu_custom_call.1} parent=1 // loop_footer_branch
      %32 = sbr.rel target = $region3
    $region8: #{tpu_custom_call.1} parent=1 // loop_exit
      _
    %663 = vsyncpa [#allocation6], 1
    %s664 = scalar_lea.sflag [#allocation6], 1
    %665 = vsyncpa %s664, 1
    %666 = vsyncpa [#allocation9], 1
    %s667 = scalar_lea.sflag [#allocation9], 1
    %668 = vsyncpa %s667, 1
    %669 = vsyncpa [#allocation7], 1
    %s670 = scalar_lea.sflag [#allocation7], 1
    %671 = vsyncpa %s670, 1
    %672 = vsyncpa [#allocation13], 1
    %s673 = scalar_lea.sflag [#allocation13], 1
    %674 = vsyncpa %s673, 1

</llo_original>
